<compile_context>
chip_gen: v7x
topology: tpu7x:2x2x1
jax: 0.10.0
libtpu: 0.0.40
codegen_flags: <defaults>
</compile_context>

<pallas_src>
import functools

import numpy as np
import jax
import jax.numpy as jnp
from jax.experimental import pallas as pl
from jax.experimental.pallas import tpu as pltpu


LANES = 128
TG_MAX = 4096   # packed rows per grid step (= 16384 original rows, 2 MiB of x). Sweep 2048-8192.
TG_MIN = 1024   # don't shrink per-step x DMA below ~0.5 MiB just to add grid steps.


def _round_up(v, m):
    return ((v + m - 1) // m) * m


def _pick_group_tile(n_groups, tg_max=TG_MAX, tg_min=TG_MIN):
    """Packed-row tile: multiple of 8 (sublane), as large as TG_MAX, but keep the grid
    >= 4 steps (>= 2 per TensorCore on v7x) unless that would push the per-step x DMA
    below ~0.5 MiB (TG_MIN) -- whichever constraint binds wins."""
    tg_max = max(8, _round_up(int(tg_max), 8))
    tg_min = max(8, _round_up(int(tg_min), 8))
    if n_groups <= tg_min:
        return n_groups                                # single full-extent step, no masking
    four_steps = _round_up(pl.cdiv(n_groups, 4), 8)    # >= 4 grid steps when n permits
    return max(tg_min, min(tg_max, four_steps))


# ----------------------------------- Pallas kernels -----------------------------------
def _packed_kernel(xp_ref, wbd_ref, o_ref):
    # xp_ref : (tg, 128)          lane-dense block of packed input rows
    #                             (pack = 128 // d_in original rows per packed row)
    # wbd_ref: (128, pack*d_out)  block-diagonal weight (pack copies of W^T), VMEM-resident
    # o_ref  : (tg, pack*d_out)   packed output block
    o_ref[...] = jnp.dot(xp_ref[...], wbd_ref[...],
                         preferred_element_type=jnp.float32)


def _plain_kernel(x_ref, wt_ref, o_ref):
    # Generic fallback when d_in does not pack into 128 lanes.
    # x_ref: (tm, d_in), wt_ref: (d_in, d_out), o_ref: (tm, d_out)
    o_ref[...] = jnp.dot(x_ref[...], wt_ref[...],
                         preferred_element_type=jnp.float32)


# -------------------------------- pallas_call wrappers --------------------------------
def _linear_pallas_packed(xp, wbd):
    n_groups, lanes = xp.shape
    out_w = wbd.shape[1]                     # pack * d_out
    tg = _pick_group_tile(n_groups)
    grid = (pl.cdiv(n_groups, tg),)
    itemsize = jnp.dtype(xp.dtype).itemsize
    cost = pl.CostEstimate(
        flops=2 * n_groups * lanes * out_w,
        transcendentals=0,
        bytes_accessed=(n_groups * lanes + lanes * out_w) * itemsize
                       + n_groups * out_w * 4)
    return pl.pallas_call(
        _packed_kernel,
        out_shape=jax.ShapeDtypeStruct((n_groups, out_w), jnp.float32),
        grid=grid,
        in_specs=[
            pl.BlockSpec((tg, lanes), lambda i: (i, 0)),     # lane-dense x blocks
            pl.BlockSpec((lanes, out_w), lambda i: (0, 0)),  # block-diag weight, resident
        ],
        out_specs=pl.BlockSpec((tg, out_w), lambda i: (i, 0)),
        compiler_params=pltpu.CompilerParams(
            dimension_semantics=("parallel",),
            vmem_limit_bytes=32 * 1024 * 1024),
        cost_estimate=cost,
    )(xp, wbd)


def _linear_pallas_plain(x, wt):
    n, d_in = x.shape
    d_out = wt.shape[1]
    tm = _pick_group_tile(n)
    grid = (pl.cdiv(n, tm),)
    return pl.pallas_call(
        _plain_kernel,
        out_shape=jax.ShapeDtypeStruct((n, d_out), jnp.float32),
        grid=grid,
        in_specs=[pl.BlockSpec((tm, d_in), lambda i: (i, 0)),
                  pl.BlockSpec((d_in, d_out), lambda i: (0, 0))],
        out_specs=pl.BlockSpec((tm, d_out), lambda i: (i, 0)),
        compiler_params=pltpu.CompilerParams(
            dimension_semantics=("parallel",),
            vmem_limit_bytes=32 * 1024 * 1024),
    )(x, wt)


# ------------------------------------- forward ----------------------------------------
@functools.partial(jax.jit, static_argnames=("compute_dtype",))
def mlp_pose_forward(x, weight, *, compute_dtype=jnp.float32):
    """y = x.astype(float32) @ weight.T   (weight: (n_output_dims, n_input_dims), no bias)."""
    if compute_dtype == jnp.float32:
        x = x.astype(jnp.float32)             # matches x.to(torch.float32) in forward()
        w = weight.astype(jnp.float32)
    else:
        # Opt-in bf16 MXU path. Only worthwhile when x already arrives in bf16 upstream;
        # otherwise this cast is itself a full HBM pass over x.
        x = x.astype(compute_dtype)
        w = weight.astype(compute_dtype)

    n, d_in = x.shape
    d_out = weight.shape[0]
    wt = w.T                                   # (d_in, d_out), tiny

    packable = (d_in <= LANES) and (LANES % d_in == 0)
    if not packable:
        # TODO(synk): d_in that doesn't divide 128 uses the generic (lane-sparse) kernel.
        return _linear_pallas_plain(x, wt)

    pack = LANES // d_in
    n_grp, rem = divmod(n, pack)
    if n_grp == 0:                             # degenerate: fewer rows than one packed group
        return jnp.dot(x, wt, preferred_element_type=jnp.float32)

    # Block-diagonal weight: pack copies of W^T -> (128, pack*d_out). Built once, tiny.
    wbd = jnp.kron(jnp.eye(pack, dtype=wt.dtype), wt)

    # Packed view of x: a free bitcast of the contiguous HBM buffer when rem == 0.
    x_main = x if rem == 0 else jax.lax.slice(x, (0, 0), (n_grp * pack, d_in))
    xp = x_main.reshape(n_grp, LANES)

    y_main = _linear_pallas_packed(xp, wbd).reshape(n_grp * pack, d_out)
    if rem == 0:
        return y_main

    # Tiny pad-free side path for the <= pack-1 remainder rows.
    x_tail = jax.lax.slice(x, (n_grp * pack, 0), (n, d_in))
    y_tail = jnp.dot(x_tail, wt, preferred_element_type=jnp.float32)
    return jnp.concatenate([y_main, y_tail], axis=0)


# --------------------------------- parameter init --------------------------------------
def init_mlp_pose_params(key, cfg):
    """torch.nn.init.kaiming_uniform_(weight, nonlinearity='relu'); Linear has bias=False."""
    fan_in = cfg["n_input_dims"]
    bound = float(np.sqrt(2.0) * np.sqrt(3.0 / fan_in))   # gain(relu)*sqrt(3/fan_in)
    return jax.random.uniform(key, (cfg["n_output_dims"], fan_in),
                              jnp.float32, minval=-bound, maxval=bound)


# ----------------------------------------- main -----------------------------------------
if __name__ == "__main__":
    key = jax.random.PRNGKey(0)
    k_x, k_w = jax.random.split(key)

    cfg = {"n_input_dims": 32, "n_output_dims": 4}
    weight = init_mlp_pose_params(k_w, cfg)                       # (4, 32)

    # n % 4 == 0 -> free packed reshape, single-kernel path.
    N = 200
    x = jax.random.uniform(k_x, (N, cfg["n_input_dims"]), jnp.float32,
                           minval=-1.0, maxval=1.0)
    out = jax.block_until_ready(mlp_pose_forward(x, weight))
    ref = jnp.dot(x, weight.T, precision=jax.lax.Precision.HIGHEST)
    assert out.shape == (N, cfg["n_output_dims"]) and out.dtype == jnp.float32
    assert jnp.allclose(out, ref, atol=2e-2, rtol=2e-2), \
        float(jnp.max(jnp.abs(out - ref)))

    # n % 4 != 0 -> exercises the tiny remainder side path.
    N2 = 199
    x2 = x[:N2]
    out2 = jax.block_until_ready(mlp_pose_forward(x2, weight))
    ref2 = jnp.dot(x2, weight.T, precision=jax.lax.Precision.HIGHEST)
    assert out2.shape == (N2, cfg["n_output_dims"])
    assert jnp.allclose(out2, ref2, atol=2e-2, rtol=2e-2)

    # Opt-in bf16 path: x arrives already in bf16 (the only case where it pays off).
    out_bf16 = jax.block_until_ready(
        mlp_pose_forward(x.astype(jnp.bfloat16), weight, compute_dtype=jnp.bfloat16))
    assert out_bf16.shape == (N, cfg["n_output_dims"])
    assert jnp.allclose(out_bf16, ref, atol=1e-1, rtol=1e-1)

    print("KERNEL_OK")
</pallas_src>

<mosaic_0001>
module attributes {stable_mosaic.version = 11 : i64} {
  func.func @_packed_kernel(%arg0: i32, %arg1: memref<50x128xf32, #tpu.memory_space<vmem>>, %arg2: memref<128x16xf32, #tpu.memory_space<vmem>>, %arg3: memref<50x16xf32, #tpu.memory_space<vmem>>) attributes {dimension_semantics = [#tpu.dimension_semantics<parallel>], iteration_bounds = array<i64: 1>, scalar_prefetch = 0 : i64, scratch_operands = 0 : i64, tpu.core_type = #tpu.core_type<tc>, window_params = [{transform_indices = @transform_0, window_bounds = array<i64: 50, 128>}, {pipeline_mode = #tpu.pipeline_mode<synchronous>, transform_indices = @transform_1, window_bounds = array<i64: 128, 16>}, {transform_indices = @transform_2, window_bounds = array<i64: 50, 16>}]} {
    %c0 = arith.constant 0 : index
    %c0_0 = arith.constant 0 : index
    %0 = vector.load %arg1[%c0, %c0_0] : memref<50x128xf32, #tpu.memory_space<vmem>>, vector<50x128xf32>
    %c0_1 = arith.constant 0 : index
    %c0_2 = arith.constant 0 : index
    %1 = vector.load %arg2[%c0_1, %c0_2] : memref<128x16xf32, #tpu.memory_space<vmem>>, vector<128x16xf32>
    %cst = arith.constant dense<0.000000e+00> : vector<50x16xf32>
    %2 = tpu.matmul %0, %1, %cst {dimension_numbers = #tpu.dot_dimension_numbers<[1], [0], [0], [1], [0, 0, 1, 1], [], []>} : vector<50x128xf32>, vector<128x16xf32>, vector<50x16xf32> -> vector<50x16xf32>
    %c0_3 = arith.constant 0 : index
    %c0_4 = arith.constant 0 : index
    %3 = vector.load %arg3[%c0_3, %c0_4] : memref<50x16xf32, #tpu.memory_space<vmem>>, vector<50x16xf32>
    tpu.vector_store %arg3[%c0_3, %c0_4], %2 {strides = array<i32>} : memref<50x16xf32, #tpu.memory_space<vmem>>, vector<50x16xf32>,
    return
  }
  func.func @transform_0(%arg0: i32) -> (i32, i32) {
    %c0_i32 = arith.constant 0 : i32
    %c0_i32_0 = arith.constant 0 : i32
    return %arg0, %c0_i32 : i32, i32
  }
  func.func @transform_1(%arg0: i32) -> (i32, i32) {
    %c0_i32 = arith.constant 0 : i32
    %c0_i32_0 = arith.constant 0 : i32
    %c0_i32_1 = arith.constant 0 : i32
    return %c0_i32, %c0_i32_0 : i32, i32
  }
  func.func @transform_2(%arg0: i32) -> (i32, i32) {
    %c0_i32 = arith.constant 0 : i32
    %c0_i32_0 = arith.constant 0 : i32
    return %arg0, %c0_i32 : i32, i32
  }
}

</mosaic_0001>

<llo_original>
// kernel: mlp_pose_forward.1
$region0: #{mlp_pose_forward.1}
  #allocation0 [shape = 'u32[]', space=smem, size = 0x4, offset = 0x4, fixed_abs, tag = 'smem constant byte address 0x4 - core index']
  #allocation1 [shape = 'u32[144,128]{1,0:T(1,128)}', space=vmem, size = 0x12000, scoped, tag = 'internal scratch']
  %s0 = inlined_call_operand.vmem [shape: f32[50,128], index: 0, kind: input, shape index: {}]
  %s1 = inlined_call_operand.vmem [shape: f32[128,16], index: 1, kind: input, shape index: {}]
  %s2 = inlined_call_operand.vmem [shape: f32[50,16], index: 2, kind: output, shape index: {}]
  %s3 = sld [smem:[#allocation0]]
  $region18: #{mlp_pose_forward.1} parent=0
    _
  %s5 = ssub.s32 1, %s3
  %s6 = scalar_select 0, %s5, %s3
  // Predicated region
  $region2: #{mlp_pose_forward.1} parent=0 // pred_check
    _
  $region3: #{mlp_pose_forward.1} parent=0 // pred_check_branch
    %8 = sbr.rel (0) target = $region5
  $region4: #{mlp_pose_forward.1} parent=0 // pred_region
    _
  $region5: #{mlp_pose_forward.1} parent=0 // pred_fallthru
    _
  // Predicated region
  $region6: #{mlp_pose_forward.1} parent=0 // pred_check
    _
  $region7: #{mlp_pose_forward.1} parent=0 // pred_check_branch
    %10 = sbr.rel (0) target = $region9
  $region8: #{mlp_pose_forward.1} parent=0 // pred_region
    _
  $region9: #{mlp_pose_forward.1} parent=0 // pred_fallthru
    _
  %v11 = vld [vmem:[%s0] sm:$0xff]
  %v12 = vld [vmem:[%s0 + $0x8] sm:$0xff]
  %v13 = vld [vmem:[%s0 + $0x10] sm:$0xff]
  %v14 = vld [vmem:[%s0 + $0x18] sm:$0xff]
  %v15 = vld [vmem:[%s0 + $0x20] sm:$0xff]
  %v16 = vld [vmem:[%s0 + $0x28] sm:$0xff]
  %v17 = vld [vmem:[%s0 + $0x30] sm:$0x3]
  %v18 = vld [vmem:[%s1] sm:$0xff]
  %v19 = vld [vmem:[%s1 + $0x8] sm:$0xff]
  %v20 = vld [vmem:[%s1 + $0x10] sm:$0xff]
  %v21 = vld [vmem:[%s1 + $0x18] sm:$0xff]
  %v22 = vld [vmem:[%s1 + $0x20] sm:$0xff]
  %v23 = vld [vmem:[%s1 + $0x28] sm:$0xff]
  %v24 = vld [vmem:[%s1 + $0x30] sm:$0xff]
  %v25 = vld [vmem:[%s1 + $0x38] sm:$0xff]
  %v26 = vld [vmem:[%s1 + $0x40] sm:$0xff]
  %v27 = vld [vmem:[%s1 + $0x48] sm:$0xff]
  %v28 = vld [vmem:[%s1 + $0x50] sm:$0xff]
  %v29 = vld [vmem:[%s1 + $0x58] sm:$0xff]
  %v30 = vld [vmem:[%s1 + $0x60] sm:$0xff]
  %v31 = vld [vmem:[%s1 + $0x68] sm:$0xff]
  %v32 = vld [vmem:[%s1 + $0x70] sm:$0xff]
  %v33 = vld [vmem:[%s1 + $0x78] sm:$0xff]
  %34 = vmatprep.subr.mxu0 0.0
  %35 = vmatpush1.msra.mxu0 %v18
  %36 = vmatprep.subr.mxu0 0.0
  %37 = vmatpush1.msra.mxu0 %v19
  %38 = vmatprep.subr.mxu0 0.0
  %39 = vmatpush1.msra.mxu0 %v20
  %40 = vmatprep.subr.mxu0 0.0
  %41 = vmatpush1.msra.mxu0 %v21
  %42 = vmatprep.subr.mxu0 0.0
  %43 = vmatpush1.msra.mxu0 %v22
  %44 = vmatprep.subr.mxu0 0.0
  %45 = vmatpush1.msra.mxu0 %v23
  %46 = vmatprep.subr.mxu0 0.0
  %47 = vmatpush1.msra.mxu0 %v24
  %48 = vmatprep.subr.mxu0 0.0
  %49 = vmatpush1.msra.mxu0 %v25
  %50 = vmatprep.subr.mxu0 0.0
  %51 = vmatpush1.msra.mxu0 %v26
  %52 = vmatprep.subr.mxu0 0.0
  %53 = vmatpush1.msra.mxu0 %v27
  %54 = vmatprep.subr.mxu0 0.0
  %55 = vmatpush1.msra.mxu0 %v28
  %56 = vmatprep.subr.mxu0 0.0
  %57 = vmatpush1.msra.mxu0 %v29
  %58 = vmatprep.subr.mxu0 0.0
  %59 = vmatpush1.msra.mxu0 %v30
  %60 = vmatprep.subr.mxu0 0.0
  %61 = vmatpush1.msra.mxu0 %v31
  %62 = vmatprep.subr.mxu0 0.0
  %63 = vmatpush1.msra.mxu0 %v32
  %64 = vmatprep.subr.mxu0 0.0
  %65 = vmatpush1.msra.mxu0 %v33
  %66 = vmatprep.subr.mxu0 0.0
  %67 = vmatpush1.msra.mxu0 0.0
  %68 = vmatprep.subr.mxu0 0.0
  %69 = vmatpush1.msra.mxu0 0.0
  %70 = vmatprep.subr.mxu0 0.0
  %71 = vmatpush1.msra.mxu0 0.0
  %72 = vmatprep.subr.mxu0 0.0
  %73 = vmatpush1.msra.mxu0 0.0
  %74 = vmatprep.subr.mxu0 0.0
  %75 = vmatpush1.msra.mxu0 0.0
  %76 = vmatprep.subr.mxu0 0.0
  %77 = vmatpush1.msra.mxu0 0.0
  %78 = vmatprep.subr.mxu0 0.0
  %79 = vmatpush1.msra.mxu0 0.0
  %80 = vmatprep.subr.mxu0 0.0
  %81 = vmatpush1.msra.mxu0 0.0
  %82 = vmatprep.subr.mxu0 0.0
  %83 = vmatpush1.msra.mxu0 0.0
  %84 = vmatprep.subr.mxu0 0.0
  %85 = vmatpush1.msra.mxu0 0.0
  %86 = vmatprep.subr.mxu0 0.0
  %87 = vmatpush1.msra.mxu0 0.0
  %88 = vmatprep.subr.mxu0 0.0
  %89 = vmatpush1.msra.mxu0 0.0
  %90 = vmatprep.subr.mxu0 0.0
  %91 = vmatpush1.msra.mxu0 0.0
  %92 = vmatprep.subr.mxu0 0.0
  %93 = vmatpush1.msra.mxu0 0.0
  %94 = vmatprep.subr.mxu0 0.0
  %95 = vmatpush1.msra.mxu0 0.0
  %96 = vmatprep.subr.mxu0 0.0
  %97 = vmatpush1.msra.mxu0 0.0
  %98 = vmatprep.mubr.f32.mxu0 0.0
  %99 = vmatmul.mubr.f32.gmra.mrb[0].mxu0 %v11
  %v100 = vpop.f32.mrb[0].mxu0
  %v101 = vadd.f32 0.0, %v100
  %v102 = vpop.f32.mrb[0].mxu0
  %103 = vmatprep.mubr.f32.mxu0 0.0
  %104 = vmatmul.mubr.f32.gmra.mrb[0].mxu0 %v12
  %v105 = vpop.f32.mrb[0].mxu0
  %v106 = vadd.f32 0.0, %v105
  %v107 = vpop.f32.mrb[0].mxu0
  %108 = vmatprep.mubr.f32.mxu0 0.0
  %109 = vmatmul.mubr.f32.gmra.mrb[0].mxu0 %v13
  %v110 = vpop.f32.mrb[0].mxu0
  %v111 = vadd.f32 0.0, %v110
  %v112 = vpop.f32.mrb[0].mxu0
  %113 = vmatprep.mubr.f32.mxu0 0.0
  %114 = vmatmul.mubr.f32.gmra.mrb[0].mxu0 %v14
  %v115 = vpop.f32.mrb[0].mxu0
  %v116 = vadd.f32 0.0, %v115
  %v117 = vpop.f32.mrb[0].mxu0
  %118 = vmatprep.mubr.f32.mxu0 0.0
  %119 = vmatmul.mubr.f32.gmra.mrb[0].mxu0 %v15
  %v120 = vpop.f32.mrb[0].mxu0
  %v121 = vadd.f32 0.0, %v120
  %v122 = vpop.f32.mrb[0].mxu0
  %123 = vmatprep.mubr.f32.mxu0 0.0
  %124 = vmatmul.mubr.f32.gmra.mrb[0].mxu0 %v16
  %v125 = vpop.f32.mrb[0].mxu0
  %v126 = vadd.f32 0.0, %v125
  %v127 = vpop.f32.mrb[0].mxu0
  %128 = vmatprep.mubr.f32.mxu0 0.0
  %129 = vmatmul.mubr.f32.gmra.mrb[0].mxu0 %v17
  %v130 = vpop.f32.mrb[0].mxu0
  %v131 = vadd.f32 0.0, %v130
  %v132 = vpop.f32.mrb[0].mxu0
  %133 = vdwg.mxu0
  %vm134 = vcmask 130048
  %135 = vst.msk [vmem:[%s2] sm:$0xff] %vm134, %v101
  %136 = vst.msk [vmem:[%s2 + $0x8] sm:$0xff] %vm134, %v106
  %137 = vst.msk [vmem:[%s2 + $0x10] sm:$0xff] %vm134, %v111
  %138 = vst.msk [vmem:[%s2 + $0x18] sm:$0xff] %vm134, %v116
  %139 = vst.msk [vmem:[%s2 + $0x20] sm:$0xff] %vm134, %v121
  %140 = vst.msk [vmem:[%s2 + $0x28] sm:$0xff] %vm134, %v126
  %vm141 = vcmask 123904
  %142 = vst.msk [vmem:[%s2 + $0x30] sm:$0x3] %vm141, %v131
  // Predicated region
  $region10: #{mlp_pose_forward.1} parent=0 // pred_check
    _
  $region11: #{mlp_pose_forward.1} parent=0 // pred_check_branch
    %144 = sbr.rel (0) target = $region13
  $region12: #{mlp_pose_forward.1} parent=0 // pred_region
    _
  $region13: #{mlp_pose_forward.1} parent=0 // pred_fallthru
    _
  // Predicated region
  $region14: #{mlp_pose_forward.1} parent=0 // pred_check
    _
  $region15: #{mlp_pose_forward.1} parent=0 // pred_check_branch
    %146 = sbr.rel (0) target = $region17
  $region16: #{mlp_pose_forward.1} parent=0 // pred_region
    _
  $region17: #{mlp_pose_forward.1} parent=0 // pred_fallthru
    _

</llo_original>
